<compile_context>
chip_gen: v7x
topology: tpu7x:2x2x1
jax: 0.10.0
libtpu: 0.0.40
codegen_flags: <defaults>
</compile_context>

<pallas_src>
import jax
import jax.numpy as jnp
from jax.experimental import pallas as pl
from jax.experimental.pallas import tpu as pltpu


def _round_up(x: int, m: int) -> int:
    return ((x + m - 1) // m) * m


def _vmem_capacity_bytes() -> int:
    """Per-TensorCore VMEM capacity; conservative fallback = v7x's 64 MiB."""
    try:
        return int(pltpu.get_tpu_info().vmem_capacity_bytes)
    except Exception:
        return 64 * 1024 * 1024


def _surrogate_mlp_kernel(x_ref, w1_ref, b1_ref, w2_ref, b2_ref, o_ref):
    """Fused 2-layer MLP surrogate on one (TM, D) tile of designs.

    x arrives straight from HBM in its original dtype and is cast to bf16
    in-register (no host-side pad/cast pass).  Both matmuls accumulate in f32
    on the MXU; the bias/ReLU epilogue stays f32 (no bf16 VPU on v5e).  Only
    the first OUT lanes of the second matmul are stored (slim writeback).
    """
    x = x_ref[...].astype(w1_ref.dtype)                       # f32 -> bf16 cast in-kernel
    h = jnp.dot(x, w1_ref[...], preferred_element_type=jnp.float32)
    h = jnp.maximum(h + b1_ref[...], 0.0)                     # f32 bias + ReLU (VPU)
    y = jnp.dot(h.astype(w2_ref.dtype), w2_ref[...],
                preferred_element_type=jnp.float32)           # (TM, OUTp) f32
    out = o_ref.shape[-1]
    o_ref[...] = (y[:, :out] + b2_ref[...]).astype(o_ref.dtype)


class BaseObjectiveTransformPallas:
    """JAX/Pallas analogue of BaseObjectiveTransform wrapping an MLP surrogate."""

    name: str = "BaseObjectiveTransform"

    _TM_CAP: int = 4096   # absolute row-tile ceiling; VMEM formula may lower it

    def __init__(self, surrogate_params, compute_dtype=jnp.bfloat16, **kwargs):
        w1, b1, w2, b2 = surrogate_params
        d, h = w1.shape
        out = w2.shape[1]
        self.d, self.h, self.out = d, h, out
        self.compute_dtype = compute_dtype

        # Pad ONLY where the MXU wants lane-dense operands (hidden dim, W2
        # output columns) to multiples of 128, once at construction time.
        # x and the kernel output stay un-padded.
        hp = _round_up(h, 128)
        outp = _round_up(out, 128)
        self.hp, self.outp = hp, outp

        self.w1 = (jnp.zeros((d, hp), compute_dtype)
                   .at[:, :h].set(w1.astype(compute_dtype)))
        self.b1 = (jnp.zeros((1, hp), jnp.float32)
                   .at[:, :h].set(b1.astype(jnp.float32)))
        self.w2 = (jnp.zeros((hp, outp), compute_dtype)
                   .at[:h, :out].set(w2.astype(compute_dtype)))
        self.b2 = b2.reshape(1, out).astype(jnp.float32)

        self._vmem_cap = _vmem_capacity_bytes()

        for key, val in kwargs.items():
            setattr(self, key, val)

    # ---- VMEM footprint / tiling ----------------------------------------
    def _per_row_vmem_bytes(self) -> int:
        # Double-buffered x/out tiles + f32 h + bf16 h copy + wide y, per row.
        return (2 * self.d * 4 + 2 * self.out * 4
                + self.hp * 6 + self.outp * 4)

    def _fixed_vmem_bytes(self) -> int:
        # Weights/biases (Pallas double-buffers even constant-index blocks).
        return 2 * (self.d * self.hp * 2 + self.hp * 4
                    + self.hp * self.outp * 2 + self.out * 4)

    def _choose_tm(self, m: int) -> int:
        # Generation-aware tile: 64 MiB/TC on v7x, 128 MiB on v5e/v6e, with
        # headroom for Mosaic internal scratch.
        budget = int(self._vmem_cap * 0.6)
        tm_vmem = (budget - self._fixed_vmem_bytes()) // max(self._per_row_vmem_bytes(), 1)
        tm_vmem = max(8, (tm_vmem // 8) * 8)
        # Keep >= 2 grid steps so both v7x TensorCores get work (and the
        # pipeline has something to overlap on single-TC chips).
        half_m = _round_up(max(pl.cdiv(m, 2), 1), 8)
        return max(8, min(self._TM_CAP, tm_vmem, half_m))

    # ---- forward ---------------------------------------------------------
    def forward(self, xq: jnp.ndarray) -> jnp.ndarray:
        """Offline predictions for the input designs xq of shape (M, D)."""
        m, d = xq.shape
        assert d == self.d, f"expected design dim {self.d}, got {d}"

        tm = self._choose_tm(m)
        grid = pl.cdiv(m, tm)

        footprint = self._fixed_vmem_bytes() + tm * self._per_row_vmem_bytes()
        vmem_limit = int(min(max(footprint + (8 << 20), 32 << 20),
                             self._vmem_cap * 0.85))

        cost = pl.CostEstimate(
            flops=2 * m * (self.d * self.hp + self.hp * self.outp),
            transcendentals=0,
            bytes_accessed=(m * self.d * xq.dtype.itemsize
                            + self.d * self.hp * 2 + self.hp * 4
                            + self.hp * self.outp * 2 + self.out * 4
                            + m * self.out * 4),
        )

        hp, outp, out = self.hp, self.outp, self.out
        y = pl.pallas_call(
            _surrogate_mlp_kernel,
            out_shape=jax.ShapeDtypeStruct((m, out), jnp.float32),
            grid_spec=pltpu.PrefetchScalarGridSpec(
                num_scalar_prefetch=0,
                grid=(grid,),
                in_specs=[
                    # x tile streamed straight from HBM (last dim = full D is legal).
                    pl.BlockSpec((tm, d), lambda i: (i, 0)),
                    # Resident params (constant index maps -> fetched once).
                    pl.BlockSpec((d, hp), lambda i: (0, 0)),     # W1
                    pl.BlockSpec((1, hp), lambda i: (0, 0)),     # b1
                    pl.BlockSpec((hp, outp), lambda i: (0, 0)),  # W2
                    pl.BlockSpec((1, out), lambda i: (0, 0)),    # b2
                ],
                # Slim output: (tm, OUT) f32; ragged last block rows are masked.
                out_specs=pl.BlockSpec((tm, out), lambda i: (i, 0)),
            ),
            compiler_params=pltpu.CompilerParams(
                dimension_semantics=("parallel",),
                vmem_limit_bytes=vmem_limit,
            ),
            cost_estimate=cost,
        )(xq, self.w1, self.b1, self.w2, self.b2)

        return y.astype(xq.dtype)

    def __call__(self, xq: jnp.ndarray) -> jnp.ndarray:
        return self.forward(xq)

    def fit(self, xp, xq, qpi=None, **kwargs) -> None:
        # TODO(synk): abstract fitting hook; no forward-pass compute to port.
        return None


def make_surrogate_params(key, d: int, h: int, out: int = 1):
    """Deterministic synthetic surrogate parameters (no checkpoint load)."""
    k1, k2 = jax.random.split(key)
    w1 = jax.random.normal(k1, (d, h), jnp.float32) / jnp.sqrt(d)
    b1 = jnp.zeros((1, h), jnp.float32)
    w2 = jax.random.normal(k2, (h, out), jnp.float32) / jnp.sqrt(h)
    b2 = jnp.zeros((1, out), jnp.float32)
    return w1, b1, w2, b2


if __name__ == "__main__":
    key = jax.random.PRNGKey(0)
    k_x, k_p = jax.random.split(key)

    # Small shapes consistent with the module: M designs of dimension D,
    # hidden width H, scalar objective.  (At this toy size the kernel is
    # overhead-dominated; sizing/tiling decisions matter only at large M.)
    M, D, H, OUT = 8, 32, 32, 1
    xq = jax.random.normal(k_x, (M, D), jnp.float32)

    params = make_surrogate_params(k_p, D, H, OUT)
    transform = BaseObjectiveTransformPallas(params)

    y = transform(xq)
    y = jax.block_until_ready(y)

    # Pure-JAX reference reproducing the same bf16-input / f32-accumulate path.
    w1, b1, w2, b2 = params
    xb = xq.astype(jnp.bfloat16).astype(jnp.float32)
    w1b = w1.astype(jnp.bfloat16).astype(jnp.float32)
    w2b = w2.astype(jnp.bfloat16).astype(jnp.float32)
    h_ref = jnp.maximum(xb @ w1b + b1, 0.0)
    y_ref = h_ref.astype(jnp.bfloat16).astype(jnp.float32) @ w2b + b2

    assert y.shape == (M, OUT)
    assert jnp.allclose(y, y_ref, atol=1e-3, rtol=1e-3), (
        f"max abs diff = {jnp.max(jnp.abs(y - y_ref))}")

    print("KERNEL_OK")
</pallas_src>

<mosaic_0001>
module attributes {stable_mosaic.version = 11 : i64} {
  func.func @_surrogate_mlp_kernel(%arg0: i32, %arg1: memref<8x32xf32, #tpu.memory_space<vmem>>, %arg2: memref<32x128xbf16, #tpu.memory_space<vmem>>, %arg3: memref<1x128xf32, #tpu.memory_space<vmem>>, %arg4: memref<128x128xbf16, #tpu.memory_space<vmem>>, %arg5: memref<1x1xf32, #tpu.memory_space<vmem>>, %arg6: memref<8x1xf32, #tpu.memory_space<vmem>>) attributes {dimension_semantics = [#tpu.dimension_semantics<parallel>], iteration_bounds = array<i64: 1>, scalar_prefetch = 0 : i64, scratch_operands = 0 : i64, tpu.core_type = #tpu.core_type<tc>, window_params = [{transform_indices = @transform_0, window_bounds = array<i64: 8, 32>}, {pipeline_mode = #tpu.pipeline_mode<synchronous>, transform_indices = @transform_1, window_bounds = array<i64: 32, 128>}, {pipeline_mode = #tpu.pipeline_mode<synchronous>, transform_indices = @transform_2, window_bounds = array<i64: 1, 128>}, {pipeline_mode = #tpu.pipeline_mode<synchronous>, transform_indices = @transform_3, window_bounds = array<i64: 128, 128>}, {pipeline_mode = #tpu.pipeline_mode<synchronous>, transform_indices = @transform_4, window_bounds = array<i64: 1, 1>}, {transform_indices = @transform_5, window_bounds = array<i64: 8, 1>}]} {
    %c0 = arith.constant 0 : index
    %c0_0 = arith.constant 0 : index
    %0 = vector.load %arg1[%c0, %c0_0] : memref<8x32xf32, #tpu.memory_space<vmem>>, vector<8x32xf32>
    %1 = arith.truncf %0 : vector<8x32xf32> to vector<8x32xbf16>
    %c0_1 = arith.constant 0 : index
    %c0_2 = arith.constant 0 : index
    %2 = vector.load %arg2[%c0_1, %c0_2] : memref<32x128xbf16, #tpu.memory_space<vmem>>, vector<32x128xbf16>
    %cst = arith.constant dense<0.000000e+00> : vector<8x128xf32>
    %3 = tpu.matmul %1, %2, %cst {dimension_numbers = #tpu.dot_dimension_numbers<[1], [0], [0], [1], [0, 0, 1, 1], [], []>} : vector<8x32xbf16>, vector<32x128xbf16>, vector<8x128xf32> -> vector<8x128xf32>
    %c0_3 = arith.constant 0 : index
    %c0_4 = arith.constant 0 : index
    %4 = vector.load %arg3[%c0_3, %c0_4] : memref<1x128xf32, #tpu.memory_space<vmem>>, vector<1x128xf32>
    %5 = vector.broadcast %4 : vector<1x128xf32> to vector<8x128xf32>
    %6 = arith.addf %3, %5 : vector<8x128xf32>
    %cst_5 = arith.constant 0.000000e+00 : f32
    %7 = vector.broadcast %cst_5 : f32 to vector<8x128xf32>
    %8 = arith.maximumf %6, %7 : vector<8x128xf32>
    %9 = arith.truncf %8 : vector<8x128xf32> to vector<8x128xbf16>
    %c0_6 = arith.constant 0 : index
    %c0_7 = arith.constant 0 : index
    %10 = vector.load %arg4[%c0_6, %c0_7] : memref<128x128xbf16, #tpu.memory_space<vmem>>, vector<128x128xbf16>
    %cst_8 = arith.constant dense<0.000000e+00> : vector<8x128xf32>
    %11 = tpu.matmul %9, %10, %cst_8 {dimension_numbers = #tpu.dot_dimension_numbers<[1], [0], [0], [1], [0, 0, 1, 1], [], []>} : vector<8x128xbf16>, vector<128x128xbf16>, vector<8x128xf32> -> vector<8x128xf32>
    %12 = vector.extract_strided_slice %11 {offsets = [0, 0], sizes = [8, 1], strides = [1, 1]} : vector<8x128xf32> to vector<8x1xf32>
    %c0_9 = arith.constant 0 : index
    %c0_10 = arith.constant 0 : index
    %13 = vector.load %arg5[%c0_9, %c0_10] : memref<1x1xf32, #tpu.memory_space<vmem>>, vector<1x1xf32>
    %14 = vector.broadcast %13 : vector<1x1xf32> to vector<8x1xf32>
    %15 = arith.addf %12, %14 : vector<8x1xf32>
    %c0_11 = arith.constant 0 : index
    %c0_12 = arith.constant 0 : index
    %16 = vector.load %arg6[%c0_11, %c0_12] : memref<8x1xf32, #tpu.memory_space<vmem>>, vector<8x1xf32>
    tpu.vector_store %arg6[%c0_11, %c0_12], %15 {strides = array<i32>} : memref<8x1xf32, #tpu.memory_space<vmem>>, vector<8x1xf32>,
    return
  }
  func.func @transform_0(%arg0: i32) -> (i32, i32) {
    %c0_i32 = arith.constant 0 : i32
    %c0_i32_0 = arith.constant 0 : i32
    return %arg0, %c0_i32 : i32, i32
  }
  func.func @transform_1(%arg0: i32) -> (i32, i32) {
    %c0_i32 = arith.constant 0 : i32
    %c0_i32_0 = arith.constant 0 : i32
    %c0_i32_1 = arith.constant 0 : i32
    return %c0_i32, %c0_i32_0 : i32, i32
  }
  func.func @transform_2(%arg0: i32) -> (i32, i32) {
    %c0_i32 = arith.constant 0 : i32
    %c0_i32_0 = arith.constant 0 : i32
    %c0_i32_1 = arith.constant 0 : i32
    return %c0_i32, %c0_i32_0 : i32, i32
  }
  func.func @transform_3(%arg0: i32) -> (i32, i32) {
    %c0_i32 = arith.constant 0 : i32
    %c0_i32_0 = arith.constant 0 : i32
    %c0_i32_1 = arith.constant 0 : i32
    return %c0_i32, %c0_i32_0 : i32, i32
  }
  func.func @transform_4(%arg0: i32) -> (i32, i32) {
    %c0_i32 = arith.constant 0 : i32
    %c0_i32_0 = arith.constant 0 : i32
    %c0_i32_1 = arith.constant 0 : i32
    return %c0_i32, %c0_i32_0 : i32, i32
  }
  func.func @transform_5(%arg0: i32) -> (i32, i32) {
    %c0_i32 = arith.constant 0 : i32
    %c0_i32_0 = arith.constant 0 : i32
    return %arg0, %c0_i32 : i32, i32
  }
}

</mosaic_0001>

<llo_original>
// kernel: tpu_custom_call.1
$region0: #{tpu_custom_call.1}
  #allocation0 [shape = 'u32[]', space=smem, size = 0x4, offset = 0x4, fixed_abs, tag = 'smem constant byte address 0x4 - core index']
  #allocation1 [shape = 'u32[144,128]{1,0:T(1,128)}', space=vmem, size = 0x12000, scoped, tag = 'internal scratch']
  #allocation2 [shape = 'f32[1,1]{1,0:T(1,128)S(1)}', space=vmem, size = 0x200, scoped, tag = 'scoped memory for tpu_custom_call.1']
  %s0 = inlined_call_operand.hbm [shape: f32[8,32], index: 0, kind: input, shape index: {}]
  %s1 = inlined_call_operand.hbm [shape: bf16[32,128], index: 1, kind: input, shape index: {}]
  %s2 = inlined_call_operand.vmem [shape: f32[1,128], index: 2, kind: input, shape index: {}]
  %s3 = inlined_call_operand.hbm [shape: bf16[128,128], index: 3, kind: input, shape index: {}]
  %s4 = inlined_call_operand.<no memory space> [shape: f32[1,1], index: 4, kind: input, shape index: {}]
  %s5 = inlined_call_operand.vmem [shape: f32[8,1], index: 5, kind: output, shape index: {}]
  %s6 = sld [smem:[#allocation0]]
  $region42: #{tpu_custom_call.1} parent=0
    _
  %s8 = ssub.s32 1, %s6
  %s9 = scalar_select 0, %s8, %s6
  %v10 = vstv %s4
  %11 = vst [vmem:[#allocation2] sm:$0x1] %v10
  $region1: #{tpu_custom_call.1} parent=0
    #allocation3 [shape = 'u8[4096]{0}', space=vmem, size = 0x1000, scoped, tag = 'input window, operand 0, single buffered']
    #allocation4 [shape = 's32[1]{0}', space=sflag, size = 0x4, scoped, tag = 'scoped memory for tpu_custom_call.1']
    #allocation5 [shape = 'u8[8192]{0}', space=vmem, size = 0x2000, scoped, tag = 'input window, operand 1, single buffered']
    #allocation6 [shape = 's32[1]{0}', space=sflag, size = 0x4, scoped, tag = 'scoped memory for tpu_custom_call.1']
    #allocation7 [shape = 'u8[32768]{0}', space=vmem, size = 0x8000, scoped, tag = 'input window, operand 3, single buffered']
    %12 = vsyncpa [#allocation4], 0
    %13 = vsyncpa [#allocation6], 0
    // Predicated region
    $region2: #{tpu_custom_call.1} parent=1 // pred_check
      _
    $region3: #{tpu_custom_call.1} parent=1 // pred_check_branch
      %15 = sbr.rel (0) target = $region5
    $region4: #{tpu_custom_call.1} parent=1 // pred_region
      %s17 = ssub.s32 128, 128
      %18 = vsyncadd [#allocation4], %s17
      %s20 = sshll.u32 [#allocation3], 4
      %s21 = int_to_ptr.vmem [resolvable:$true] %s20
      %23 = dma.hbm_to_vmem [thread:$0]  %s0, 128, %s21, [#allocation4]
    $region5: #{tpu_custom_call.1} parent=1 // pred_fallthru
      _
    // Predicated region
    $region6: #{tpu_custom_call.1} parent=1 // pred_check
      _
    $region7: #{tpu_custom_call.1} parent=1 // pred_check_branch
      %25 = sbr.rel (0) target = $region9
    $region8: #{tpu_custom_call.1} parent=1 // pred_region
      %s27 = ssub.s32 256, 256
      %28 = vsyncadd [#allocation6], %s27
      %s29 = sshll.u32 [#allocation5], 4
      %s30 = int_to_ptr.vmem [resolvable:$true] %s29
      %35 = dma.hbm_to_vmem [thread:$0]  %s1, 256, %s30, [#allocation6], 64, 64, 4
    $region9: #{tpu_custom_call.1} parent=1 // pred_fallthru
      _
    // Predicated region
    $region10: #{tpu_custom_call.1} parent=1 // pred_check
      _
    $region11: #{tpu_custom_call.1} parent=1 // pred_check_branch
      %37 = sbr.rel (0) target = $region13
    $region12: #{tpu_custom_call.1} parent=1 // pred_region
      _
    $region13: #{tpu_custom_call.1} parent=1 // pred_fallthru
      _
    // Predicated region
    $region14: #{tpu_custom_call.1} parent=1 // pred_check
      _
    $region15: #{tpu_custom_call.1} parent=1 // pred_check_branch
      %39 = sbr.rel (0) target = $region17
    $region16: #{tpu_custom_call.1} parent=1 // pred_region
      %s41 = ssub.s32 1024, 1024
      %42 = vsyncadd [#allocation6], %s41
      %s43 = sshll.u32 [#allocation7], 4
      %s44 = int_to_ptr.vmem [resolvable:$true] %s43
      %49 = dma.hbm_to_vmem [thread:$0]  %s3, 1024, %s44, [#allocation6], 64, 64, 4
    $region17: #{tpu_custom_call.1} parent=1 // pred_fallthru
      _
    // Predicated region
    $region18: #{tpu_custom_call.1} parent=1 // pred_check
      _
    $region19: #{tpu_custom_call.1} parent=1 // pred_check_branch
      %51 = sbr.rel (0) target = $region21
    $region20: #{tpu_custom_call.1} parent=1 // pred_region
      _
    $region21: #{tpu_custom_call.1} parent=1 // pred_fallthru
      _
    // Predicated region
    $region22: #{tpu_custom_call.1} parent=1 // pred_check
      _
    $region23: #{tpu_custom_call.1} parent=1 // pred_check_branch
      %53 = sbr.rel (0) target = $region25
    $region24: #{tpu_custom_call.1} parent=1 // pred_region
      %54 = dma.done [#allocation4], 128
    $region25: #{tpu_custom_call.1} parent=1 // pred_fallthru
      _
    // Predicated region
    $region26: #{tpu_custom_call.1} parent=1 // pred_check
      _
    $region27: #{tpu_custom_call.1} parent=1 // pred_check_branch
      %56 = sbr.rel (0) target = $region29
    $region28: #{tpu_custom_call.1} parent=1 // pred_region
      %57 = dma.done [#allocation6], 256
    $region29: #{tpu_custom_call.1} parent=1 // pred_fallthru
      _
    // Predicated region
    $region30: #{tpu_custom_call.1} parent=1 // pred_check
      _
    $region31: #{tpu_custom_call.1} parent=1 // pred_check_branch
      %59 = sbr.rel (0) target = $region33
    $region32: #{tpu_custom_call.1} parent=1 // pred_region
      %60 = dma.done [#allocation6], 1024
    $region33: #{tpu_custom_call.1} parent=1 // pred_fallthru
      _
    %v62 = vld [vmem:[#allocation3] sm:$0xff]
    %v63 = vpack.c.bf16 %v62, %v62
    %v64 = vld [vmem:[#allocation5] sm:$0xf]
    %v65 = vld [vmem:[#allocation5 + $0x4] sm:$0xf]
    %v66 = vld [vmem:[#allocation5 + $0x8] sm:$0xf]
    %v67 = vld [vmem:[#allocation5 + $0xc] sm:$0xf]
    %v68 = vld [vmem:[%s2] sm:$0x1]
    %v70 = vlaneseq
    %v71 = vshrl.u32 %v70, 7
    %v72 = vsub.s32 0, %v71
    %v73 = vrot.slane %v68, %v72
    %v79 = vunpack.c.l.b16 %v64
    %v80 = vunpack.c.l.b16 %v65
    %v81 = vunpack.c.l.b16 %v66
    %v82 = vunpack.c.l.b16 %v67
    %v83 = vpack.c.b16 %v80, %v79
    %v84 = vpack.c.b16 %v82, %v81
    %vm87 = vcmask 261120
    %v89 = vsel %vm87, %v63, 0
    %91 = vmatprep.subr.bf16.mxu0 0
    %92 = vmatpush1.bf16.msra.mxu0 %v83
    %93 = vmatprep.subr.bf16.mxu0 0
    %94 = vmatpush1.bf16.msra.mxu0 %v84
    %95 = vmatprep.subr.bf16.mxu0 0
    %96 = vmatpush1.bf16.msra.mxu0 0
    %97 = vmatprep.subr.bf16.mxu0 0
    %98 = vmatpush1.bf16.msra.mxu0 0
    %99 = vmatprep.subr.bf16.mxu0 0
    %100 = vmatpush1.bf16.msra.mxu0 0
    %101 = vmatprep.subr.bf16.mxu0 0
    %102 = vmatpush1.bf16.msra.mxu0 0
    %103 = vmatprep.subr.bf16.mxu0 0
    %104 = vmatpush1.bf16.msra.mxu0 0
    %105 = vmatprep.subr.bf16.mxu0 0
    %106 = vmatpush1.bf16.msra.mxu0 0
    %107 = vmatprep.subr.bf16.mxu0 0
    %108 = vmatpush1.bf16.msra.mxu0 0
    %109 = vmatprep.subr.bf16.mxu0 0
    %110 = vmatpush1.bf16.msra.mxu0 0
    %111 = vmatprep.subr.bf16.mxu0 0
    %112 = vmatpush1.bf16.msra.mxu0 0
    %113 = vmatprep.subr.bf16.mxu0 0
    %114 = vmatpush1.bf16.msra.mxu0 0
    %115 = vmatprep.subr.bf16.mxu0 0
    %116 = vmatpush1.bf16.msra.mxu0 0
    %117 = vmatprep.subr.bf16.mxu0 0
    %118 = vmatpush1.bf16.msra.mxu0 0
    %119 = vmatprep.subr.bf16.mxu0 0
    %120 = vmatpush1.bf16.msra.mxu0 0
    %121 = vmatprep.subr.bf16.mxu0 0
    %122 = vmatpush1.bf16.msra.mxu0 0
    %123 = vmatprep.mubr.bf16.mxu0 0
    %124 = vmatmul.mubr.bf16.gmra.mrb[0].mxu0 %v89
    %v125 = vpop.f32.mrb[0].mxu0
    %v126 = vadd.f32 %v73, %v125
    %v127 = vpop.f32.mrb[0].mxu0
    %v128 = vpop.f32.mrb[0].mxu0
    %v129 = vpop.f32.mrb[0].mxu0
    %130 = vdwg.mxu0
    %v131 = vmax.f32 %v126, 0.0
    %v132 = vpack.c.bf16 %v131, %v131
    %v133 = vld [vmem:[#allocation7] sm:$0xf]
    %v134 = vld [vmem:[#allocation7 + $0x4] sm:$0xf]
    %v135 = vld [vmem:[#allocation7 + $0x8] sm:$0xf]
    %v136 = vld [vmem:[#allocation7 + $0xc] sm:$0xf]
    %v137 = vld [vmem:[#allocation7 + $0x10] sm:$0xf]
    %v138 = vld [vmem:[#allocation7 + $0x14] sm:$0xf]
    %v139 = vld [vmem:[#allocation7 + $0x18] sm:$0xf]
    %v140 = vld [vmem:[#allocation7 + $0x1c] sm:$0xf]
    %v141 = vld [vmem:[#allocation7 + $0x20] sm:$0xf]
    %v142 = vld [vmem:[#allocation7 + $0x24] sm:$0xf]
    %v143 = vld [vmem:[#allocation7 + $0x28] sm:$0xf]
    %v144 = vld [vmem:[#allocation7 + $0x2c] sm:$0xf]
    %v145 = vld [vmem:[#allocation7 + $0x30] sm:$0xf]
    %v146 = vld [vmem:[#allocation7 + $0x34] sm:$0xf]
    %v147 = vld [vmem:[#allocation7 + $0x38] sm:$0xf]
    %v148 = vld [vmem:[#allocation7 + $0x3c] sm:$0xf]
    %v165 = vunpack.c.l.b16 %v133
    %v166 = vunpack.c.l.b16 %v134
    %v167 = vunpack.c.l.b16 %v135
    %v168 = vunpack.c.l.b16 %v136
    %v169 = vunpack.c.l.b16 %v137
    %v170 = vunpack.c.l.b16 %v138
    %v171 = vunpack.c.l.b16 %v139
    %v172 = vunpack.c.l.b16 %v140
    %v173 = vunpack.c.l.b16 %v141
    %v174 = vunpack.c.l.b16 %v142
    %v175 = vunpack.c.l.b16 %v143
    %v176 = vunpack.c.l.b16 %v144
    %v177 = vunpack.c.l.b16 %v145
    %v178 = vunpack.c.l.b16 %v146
    %v179 = vunpack.c.l.b16 %v147
    %v180 = vunpack.c.l.b16 %v148
    %v181 = vpack.c.b16 %v166, %v165
    %v182 = vpack.c.b16 %v168, %v167
    %v183 = vpack.c.b16 %v170, %v169
    %v184 = vpack.c.b16 %v172, %v171
    %v185 = vpack.c.b16 %v174, %v173
    %v186 = vpack.c.b16 %v176, %v175
    %v187 = vpack.c.b16 %v178, %v177
    %v188 = vpack.c.b16 %v180, %v179
    %197 = vmatprep.subr.bf16.mxu0 0
    %198 = vmatpush1.bf16.msra.mxu0 %v181
    %199 = vmatprep.subr.bf16.mxu0 0
    %200 = vmatpush1.bf16.msra.mxu0 %v182
    %201 = vmatprep.subr.bf16.mxu0 0
    %202 = vmatpush1.bf16.msra.mxu0 %v183
    %203 = vmatprep.subr.bf16.mxu0 0
    %204 = vmatpush1.bf16.msra.mxu0 %v184
    %205 = vmatprep.subr.bf16.mxu0 0
    %206 = vmatpush1.bf16.msra.mxu0 %v185
    %207 = vmatprep.subr.bf16.mxu0 0
    %208 = vmatpush1.bf16.msra.mxu0 %v186
    %209 = vmatprep.subr.bf16.mxu0 0
    %210 = vmatpush1.bf16.msra.mxu0 %v187
    %211 = vmatprep.subr.bf16.mxu0 0
    %212 = vmatpush1.bf16.msra.mxu0 %v188
    %213 = vmatprep.subr.bf16.mxu0 0
    %214 = vmatpush1.bf16.msra.mxu0 0
    %215 = vmatprep.subr.bf16.mxu0 0
    %216 = vmatpush1.bf16.msra.mxu0 0
    %217 = vmatprep.subr.bf16.mxu0 0
    %218 = vmatpush1.bf16.msra.mxu0 0
    %219 = vmatprep.subr.bf16.mxu0 0
    %220 = vmatpush1.bf16.msra.mxu0 0
    %221 = vmatprep.subr.bf16.mxu0 0
    %222 = vmatpush1.bf16.msra.mxu0 0
    %223 = vmatprep.subr.bf16.mxu0 0
    %224 = vmatpush1.bf16.msra.mxu0 0
    %225 = vmatprep.subr.bf16.mxu0 0
    %226 = vmatpush1.bf16.msra.mxu0 0
    %227 = vmatprep.subr.bf16.mxu0 0
    %228 = vmatpush1.bf16.msra.mxu0 0
    %229 = vmatprep.mubr.bf16.mxu0 0
    %230 = vmatmul.mubr.bf16.gmra.mrb[0].mxu0 %v132
    %v231 = vpop.f32.mrb[0].mxu0
    %v232 = vadd.f32 0.0, %v231
    %v233 = vpop.f32.mrb[0].mxu0
    %v234 = vpop.f32.mrb[0].mxu0
    %v235 = vpop.f32.mrb[0].mxu0
    %236 = vdwg.mxu0
    %v237 = vld [vmem:[#allocation2] sm:$0x1]
    %v239 = vlaneseq
    %v240 = vshrl.u32 %v239, 7
    %v241 = vsub.s32 0, %v240
    %v242 = vrot.slane %v237, %v241
    %v244 = vadd.f32 %v232, %v242
    %vm245 = vcmask 7168
    %246 = vst.msk [vmem:[%s5] sm:$0xff] %vm245, %v244
    // Predicated region
    $region34: #{tpu_custom_call.1} parent=1 // pred_check
      _
    $region35: #{tpu_custom_call.1} parent=1 // pred_check_branch
      %248 = sbr.rel (0) target = $region37
    $region36: #{tpu_custom_call.1} parent=1 // pred_region
      _
    $region37: #{tpu_custom_call.1} parent=1 // pred_fallthru
      _
    // Predicated region
    $region38: #{tpu_custom_call.1} parent=1 // pred_check
      _
    $region39: #{tpu_custom_call.1} parent=1 // pred_check_branch
      %250 = sbr.rel (0) target = $region41
    $region40: #{tpu_custom_call.1} parent=1 // pred_region
      _
    $region41: #{tpu_custom_call.1} parent=1 // pred_fallthru
      _
    %251 = vsyncpa [#allocation4], 1
    %252 = vsyncpa [#allocation6], 1

</llo_original>
